<compile_context>
chip_gen: v5e
topology: v5e:2x2
jax: 0.10.0
libtpu: 0.0.40
codegen_flags: <defaults>
</compile_context>

<pallas_src>
import functools

import numpy as np
import jax
import jax.numpy as jnp
from jax.experimental import pallas as pl
from jax.experimental.pallas import tpu as pltpu

TARGET_BLOCK_BYTES = 4 * 1024 * 1024     # ~4 MiB blocks: near roofline, v7x-safe
VMEM_LIMIT_BYTES = 32 * 1024 * 1024      # double-buffered working set fits on all gens
MIN_PALLAS_ELEMS = 512 * 1024            # below this, pure jnp (launch cost dominates)


# ---------------------------------------------------------------- kernels ---

def _uniform_quant_kernel(x_ref, o_ref, *, scale, inv_scale):
    # out = round(x * (n / v_max)) * (v_max / n)   (constants folded: 2 VPU muls)
    x = x_ref[...].astype(jnp.float32)           # f32 keeps round() exact for bf16 in
    o_ref[...] = (jnp.round(x * scale) * inv_scale).astype(o_ref.dtype)


def _abs_mean_partial_kernel(x_ref, o_ref, acc_ref, *, total_rows, inv_n):
    # Partial mean(|x|) over this core's lane-slice of the slab.
    # Steady state: |x| + (block_rows//8) vreg adds into an (8, lanes) accumulator
    # (pure VALU, no XLU).  The cross-sublane/lane collapse, the tail-row mask of
    # the (possibly partial) last block, and the 1/n_el scaling happen once in the
    # last-step epilogue, so the kernel emits the per-core E partial directly.
    s = pl.program_id(1)
    last = pl.num_programs(1) - 1
    br, lp = x_ref.shape

    @pl.when(s == 0)
    def _():
        acc_ref[...] = jnp.zeros_like(acc_ref)

    x = jnp.abs(x_ref[...].astype(jnp.float32))

    @pl.when(s != last)
    def _():
        acc_ref[...] += x.reshape(br // 8, 8, lp).sum(axis=0)

    @pl.when(s == last)
    def _():
        # Mask rows past the end of the slab (garbage rows of the partial block).
        row = s * br + jax.lax.broadcasted_iota(jnp.int32, (br, lp), 0)
        xm = jnp.where(row < total_rows, x, 0.0)
        acc_ref[...] += xm.reshape(br // 8, 8, lp).sum(axis=0)
        o_ref[...] = (jnp.sum(acc_ref[...]) * inv_n).reshape(1, 1, 1)


def _sign_scale_kernel(e_ref, x_ref, o_ref):
    # out = sign(x) * E  (== sign(x / E) * E for E > 0; no per-element divide).
    # E arrives via scalar prefetch (SMEM).  Math stays in the input dtype so
    # packed bf16/fp16 vregs stay packed.
    x = x_ref[...]
    e = e_ref[0].astype(x.dtype)
    o_ref[...] = (jnp.sign(x) * e).astype(o_ref.dtype)


# ---------------------------------------------------------------- planning ---

def _round_up(a, m):
    return -(-a // m) * m


def _plan(n_el, itemsize, block_bytes):
    """Pick (lanes, rows, block_rows, padded_elems) for a lane-dense slab."""
    lanes = next((l for l in (512, 256, 128) if n_el % l == 0), 512)
    padded = _round_up(n_el, lanes)
    rows = padded // lanes
    target_rows = max(8, (block_bytes // (lanes * itemsize)) // 8 * 8)
    block_rows = min(target_rows, _round_up(rows, 8))
    return lanes, rows, block_rows, padded


# ----------------------------------------------------------------- wrapper ---

class VoltageQuantize:
    """JAX/Pallas port of torchonn's voltage_quantize_fn (forward only)."""

    def __init__(self, v_bit, v_pi, v_max, *,
                 min_pallas_elems=MIN_PALLAS_ELEMS,
                 block_bytes=TARGET_BLOCK_BYTES):
        assert 0 < v_bit <= 32
        self.v_bit = int(v_bit)
        self.v_pi = float(v_pi)
        self.v_max = float(v_max)
        self.gamma = np.pi / self.v_pi ** 2
        self.pi = np.pi
        self.min_pallas_elems = int(min_pallas_elems)
        self.block_bytes = int(block_bytes)

    # -- small-tensor path: pallas_call fixed cost dominates; let XLA fuse it --
    def _jnp_forward(self, x):
        if self.v_bit == 1:
            E = jnp.mean(jnp.abs(x))
            # sign(x) * E == sign(x / E) * E for E > 0 (all-zero input: 0 vs torch NaN)
            return (jnp.sign(x) * E).astype(x.dtype)
        n = float(2 ** self.v_bit - 1)
        y = jnp.round(x.astype(jnp.float32) * (n / self.v_max)) * (self.v_max / n)
        return y.astype(x.dtype)

    def __call__(self, x):
        if self.v_bit == 32:
            return x
        n_el = int(x.size)
        if n_el == 0 or n_el < self.min_pallas_elems:
            return self._jnp_forward(x)
        return self._pallas_forward(x)

    def _pallas_forward(self, x):
        orig_shape = x.shape
        dtype = x.dtype
        n_el = int(x.size)
        lanes, rows, block_rows, padded = _plan(n_el, dtype.itemsize, self.block_bytes)

        flat = x.reshape(-1)
        if padded != n_el:
            # Only for element counts that are not a multiple of 128.
            # TODO(synk): a masked pltpu.store tail block would remove this copy.
            flat = jnp.pad(flat, (0, padded - n_el))
        x2d = flat.reshape(rows, lanes)
        steps = pl.cdiv(rows, block_rows)

        elemwise_params = pltpu.CompilerParams(
            dimension_semantics=("parallel",),        # megacore-sharded on v7x
            vmem_limit_bytes=VMEM_LIMIT_BYTES)

        if self.v_bit == 1:
            # Pass 1: per-core partial abs-means.  Two lane-half partials so v7x's
            # two TensorCores each stream half the tensor; on single-core chips it
            # is just two sequential half-width sweeps over the same bytes.
            n_part = 2 if lanes >= 256 else 1
            lanes_p = lanes // n_part
            red_spec = pl.BlockSpec((block_rows, lanes_p), lambda c, s: (s, c))
            part_spec = pl.BlockSpec((1, 1, 1), lambda c, s: (c, 0, 0))
            abs_kern = functools.partial(_abs_mean_partial_kernel,
                                         total_rows=rows, inv_n=1.0 / n_el)
            partials = pl.pallas_call(
                abs_kern,
                out_shape=jax.ShapeDtypeStruct((n_part, 1, 1), jnp.float32),
                grid_spec=pltpu.PrefetchScalarGridSpec(
                    num_scalar_prefetch=0,
                    grid=(n_part, steps),
                    in_specs=[red_spec],
                    out_specs=part_spec,
                    scratch_shapes=[pltpu.VMEM((8, lanes_p), jnp.float32)],
                ),
                compiler_params=pltpu.CompilerParams(
                    dimension_semantics=("parallel", "arbitrary"),
                    vmem_limit_bytes=VMEM_LIMIT_BYTES),
            )(x2d)
            E = jnp.sum(partials).reshape(1)          # mean(|x|), f32, shape (1,)

            # Pass 2: elementwise sign(x) * E, E delivered via scalar prefetch.
            tile_p = pl.BlockSpec((block_rows, lanes), lambda i, e: (i, 0))
            out2d = pl.pallas_call(
                _sign_scale_kernel,
                out_shape=jax.ShapeDtypeStruct((rows, lanes), dtype),
                grid_spec=pltpu.PrefetchScalarGridSpec(
                    num_scalar_prefetch=1,
                    grid=(steps,),
                    in_specs=[tile_p],
                    out_specs=tile_p,
                ),
                compiler_params=elemwise_params,
            )(E, x2d)
        else:
            tile = pl.BlockSpec((block_rows, lanes), lambda i: (i, 0))
            n = float(2 ** self.v_bit - 1)
            kern = functools.partial(_uniform_quant_kernel,
                                     scale=n / self.v_max,
                                     inv_scale=self.v_max / n)
            out2d = pl.pallas_call(
                kern,
                out_shape=jax.ShapeDtypeStruct((rows, lanes), dtype),
                grid_spec=pltpu.PrefetchScalarGridSpec(
                    num_scalar_prefetch=0,
                    grid=(steps,),
                    in_specs=[tile],
                    out_specs=tile,
                ),
                compiler_params=elemwise_params,
            )(x2d)

        out = out2d.reshape(-1)
        if padded != n_el:                 # only when padding was needed
            out = out[:n_el]
        return out.reshape(orig_shape)


# -------------------------------------------------------------- reference ---

def _ref_forward(x, v_bit, v_max):
    if v_bit == 32:
        return x
    if v_bit == 1:
        E = jnp.mean(jnp.abs(x))
        # sign(x / E) * E == sign(x) * E for E > 0; written without the divide so
        # the comparison is not sensitive to underflow.  All-zero input is the only
        # behavioral divergence from the torch reference (0 here vs NaN there).
        return jnp.sign(x) * E
    n = float(2 ** v_bit - 1)
    # Same constant folding as the kernel (mathematically identical to
    # round(x / v_max * n) / n * v_max) so the comparison is FP-exact.
    return jnp.round(x * (n / v_max)) * (v_max / n)


# ------------------------------------------------------------------- main ---

if __name__ == "__main__":
    root = jax.random.PRNGKey(0)
    k0, k1, k2 = jax.random.split(root, 3)
    v_pi, v_max = 4.36, 10.8

    def check(out, ref):
        np.testing.assert_allclose(np.asarray(out), np.asarray(ref),
                                   rtol=1e-5, atol=1e-5)

    # --- module-default usage on an NCHW-style input [2, 4, 16, 16] ----------
    x = jax.random.normal(k0, (2, 4, 16, 16), dtype=jnp.float32) * 5.0

    q8 = VoltageQuantize(v_bit=8, v_pi=v_pi, v_max=v_max)
    check(jax.block_until_ready(q8(x)), _ref_forward(x, 8, v_max))

    q1 = VoltageQuantize(v_bit=1, v_pi=v_pi, v_max=v_max)
    check(jax.block_until_ready(q1(x)), _ref_forward(x, 1, v_max))

    q32 = VoltageQuantize(v_bit=32, v_pi=v_pi, v_max=v_max)
    np.testing.assert_allclose(np.asarray(jax.block_until_ready(q32(x))),
                               np.asarray(x))

    # --- force the Pallas path on small shapes (min_pallas_elems=0) ----------
    # a) lane-aligned, single (partial) block: rows=4 inside an 8-row block
    for bit in (8, 1):
        q = VoltageQuantize(v_bit=bit, v_pi=v_pi, v_max=v_max, min_pallas_elems=0)
        check(jax.block_until_ready(q(x)), _ref_forward(x, bit, v_max))

    # b) multi-step pipeline (small block_bytes -> several grid steps)
    xb = jax.random.normal(k1, (2, 4, 64, 64), dtype=jnp.float32) * 5.0
    for bit in (8, 1):
        q = VoltageQuantize(v_bit=bit, v_pi=v_pi, v_max=v_max,
                            min_pallas_elems=0, block_bytes=16 * 1024)
        check(jax.block_until_ready(q(xb)), _ref_forward(xb, bit, v_max))

    # c) misaligned element count (pad path) and 128-lane slab with a partial tail
    xc = jax.random.normal(k2, (3, 5, 7, 11), dtype=jnp.float32) * 5.0
    xd = jax.random.normal(k2, (2, 3, 40, 40), dtype=jnp.float32) * 5.0
    for bit in (8, 1):
        q = VoltageQuantize(v_bit=bit, v_pi=v_pi, v_max=v_max,
                            min_pallas_elems=0, block_bytes=16 * 1024)
        check(jax.block_until_ready(q(xc)), _ref_forward(xc, bit, v_max))
        check(jax.block_until_ready(q(xd)), _ref_forward(xd, bit, v_max))

    print("KERNEL_OK")
</pallas_src>

<mosaic_0001>
module attributes {stable_mosaic.version = 11 : i64} {
  func.func @_uniform_quant_kernel(%arg0: i32, %arg1: memref<8x512xf32, #tpu.memory_space<vmem>>, %arg2: memref<8x512xf32, #tpu.memory_space<vmem>>) attributes {dimension_semantics = [#tpu.dimension_semantics<parallel>], iteration_bounds = array<i64: 1>, scalar_prefetch = 0 : i64, scratch_operands = 0 : i64, tpu.core_type = #tpu.core_type<tc>, window_params = [{transform_indices = @transform_0, window_bounds = array<i64: 8, 512>}, {transform_indices = @transform_1, window_bounds = array<i64: 8, 512>}]} {
    %c0 = arith.constant 0 : index
    %c0_0 = arith.constant 0 : index
    %0 = vector.load %arg1[%c0, %c0_0] : memref<8x512xf32, #tpu.memory_space<vmem>>, vector<8x512xf32>
    %cst = arith.constant 23.6111107 : f32
    %1 = vector.broadcast %cst : f32 to vector<8x512xf32>
    %2 = arith.mulf %0, %1 : vector<8x512xf32>
    %3 = math.roundeven %2 : vector<8x512xf32>
    %cst_1 = arith.constant 0.0423529409 : f32
    %4 = vector.broadcast %cst_1 : f32 to vector<8x512xf32>
    %5 = arith.mulf %3, %4 : vector<8x512xf32>
    %c0_2 = arith.constant 0 : index
    %c0_3 = arith.constant 0 : index
    %6 = vector.load %arg2[%c0_2, %c0_3] : memref<8x512xf32, #tpu.memory_space<vmem>>, vector<8x512xf32>
    tpu.vector_store %arg2[%c0_2, %c0_3], %5 {strides = array<i32>} : memref<8x512xf32, #tpu.memory_space<vmem>>, vector<8x512xf32>,
    return
  }
  func.func @transform_0(%arg0: i32) -> (i32, i32) {
    %c0_i32 = arith.constant 0 : i32
    %c0_i32_0 = arith.constant 0 : i32
    return %arg0, %c0_i32 : i32, i32
  }
  func.func @transform_1(%arg0: i32) -> (i32, i32) {
    %c0_i32 = arith.constant 0 : i32
    %c0_i32_0 = arith.constant 0 : i32
    return %arg0, %c0_i32 : i32, i32
  }
}

</mosaic_0001>

<llo_original>
// kernel: tpu_custom_call.1
$region0: #{tpu_custom_call.1}
  #allocation0 [shape = 'u32[]', space=smem, size = 0x4, offset = 0x4, fixed_abs, tag = 'smem constant byte address 0x4 - core index']
  #allocation1 [shape = 'u32[72,128]{1,0:T(1,128)}', space=vmem, size = 0x9000, scoped, tag = 'internal scratch']
  %s0 = inlined_call_operand.hbm [shape: f32[4,512], index: 0, kind: input, shape index: {}]
  %s1 = inlined_call_operand.hbm [shape: f32[4,512], index: 1, kind: output, shape index: {}]
  %s2 = sld [smem:[#allocation0]]
  $region18: #{tpu_custom_call.1} parent=0
    _
  %s4 = ssub.s32 1, %s2
  %s5 = scalar_select 0, %s4, %s2
  $region1: #{tpu_custom_call.1} parent=0
    #allocation2 [shape = 'u8[16384]{0}', space=vmem, size = 0x4000, scoped, tag = 'input window, operand 0, single buffered']
    #allocation3 [shape = 's32[1]{0}', space=sflag, size = 0x4, scoped, tag = 'scoped memory for tpu_custom_call.1']
    #allocation4 [shape = 's32[1]{0}', space=sflag, size = 0x4, scoped, tag = 'scoped memory for tpu_custom_call.1']
    #allocation5 [shape = 'u8[16384]{0}', space=vmem, size = 0x4000, scoped, tag = 'output window, operand 0, single buffered']
    %6 = vsyncpa [#allocation3], 0
    %7 = vsyncpa [#allocation4], 0
    // Predicated region
    $region2: #{tpu_custom_call.1} parent=1 // pred_check
      _
    $region3: #{tpu_custom_call.1} parent=1 // pred_check_branch
      %9 = sbr.rel (0) target = $region5
    $region4: #{tpu_custom_call.1} parent=1 // pred_region
      %11 = vsyncadd [#allocation3], 256
      %s12 = sshll.u32 %s0, 4
      %s13 = int_to_ptr.hbm [resolvable:$true] %s12
      %s14 = sshll.u32 [#allocation2], 4
      %s15 = int_to_ptr.vmem [resolvable:$true] %s14
      %20 = dma.hbm_to_vmem [thread:$0]  %s13, 256, %s15, [#allocation3], 256, 256, 16
    $region5: #{tpu_custom_call.1} parent=1 // pred_fallthru
      _
    // Predicated region
    $region6: #{tpu_custom_call.1} parent=1 // pred_check
      _
    $region7: #{tpu_custom_call.1} parent=1 // pred_check_branch
      %22 = sbr.rel (0) target = $region9
    $region8: #{tpu_custom_call.1} parent=1 // pred_region
      %24 = dma.done [#allocation3], 512
    $region9: #{tpu_custom_call.1} parent=1 // pred_fallthru
      _
    %v25 = vld [vmem:[#allocation2] sm:$0xff]
    %v26 = vld [vmem:[#allocation2 + $0x8] sm:$0xff]
    %v27 = vld [vmem:[#allocation2 + $0x10] sm:$0xff]
    %v28 = vld [vmem:[#allocation2 + $0x18] sm:$0xff]
    %v29 = vmul.f32 %v25, 23.61111
    %v30 = vmul.f32 %v26, 23.61111
    %v31 = vmul.f32 %v27, 23.61111
    %v32 = vmul.f32 %v28, 23.61111
    %v33 = vround.ne.pseudo %v29
    %v34 = vround.ne.pseudo %v30
    %v35 = vround.ne.pseudo %v31
    %v36 = vround.ne.pseudo %v32
    %v37 = vmul.f32 %v33, 0.04235294
    %v38 = vmul.f32 %v34, 0.04235294
    %v39 = vmul.f32 %v35, 0.04235294
    %v40 = vmul.f32 %v36, 0.04235294
    %41 = vst [vmem:[#allocation5] sm:$0xff] %v37
    %42 = vst [vmem:[#allocation5 + $0x8] sm:$0xff] %v38
    %43 = vst [vmem:[#allocation5 + $0x10] sm:$0xff] %v39
    %44 = vst [vmem:[#allocation5 + $0x18] sm:$0xff] %v40
    // Predicated region
    $region10: #{tpu_custom_call.1} parent=1 // pred_check
      _
    $region11: #{tpu_custom_call.1} parent=1 // pred_check_branch
      %46 = sbr.rel (0) target = $region13
    $region12: #{tpu_custom_call.1} parent=1 // pred_region
      %48 = vsyncadd [#allocation4], 256
      %s49 = sshll.u32 [#allocation5], 4
      %s50 = int_to_ptr.vmem [resolvable:$true] %s49
      %s51 = sshll.u32 %s1, 4
      %s52 = int_to_ptr.hbm [resolvable:$true] %s51
      %57 = dma.vmem_to_hbm [thread:$0]  %s50, 256, %s52, [#allocation4], 256, 256, 16
    $region13: #{tpu_custom_call.1} parent=1 // pred_fallthru
      _
    // Predicated region
    $region14: #{tpu_custom_call.1} parent=1 // pred_check
      _
    $region15: #{tpu_custom_call.1} parent=1 // pred_check_branch
      %59 = sbr.rel (0) target = $region17
    $region16: #{tpu_custom_call.1} parent=1 // pred_region
      %61 = dma.done [#allocation4], 512
    $region17: #{tpu_custom_call.1} parent=1 // pred_fallthru
      _
    %62 = vsyncpa [#allocation3], 1
    %63 = vsyncpa [#allocation4], 1

</llo_original>
